<compile_context>
chip_gen: v5e
topology: v5e:2x2
jax: 0.10.0
libtpu: 0.0.40
codegen_flags: <defaults>
</compile_context>

<pallas_src>
import functools

import jax
import jax.numpy as jnp
from jax.experimental import pallas as pl
from jax.experimental.pallas import tpu as pltpu

EPS = 1e-5


def _layernorm_fused(x, gamma, beta):
    """LayerNorm over the last axis using single-pass statistics (one reduction pass)."""
    mean = jnp.mean(x, axis=-1, keepdims=True)
    mean_sq = jnp.mean(x * x, axis=-1, keepdims=True)
    var = jnp.maximum(mean_sq - mean * mean, 0.0)
    return (x - mean) * jax.lax.rsqrt(var + EPS) * gamma + beta


def deepaffine_kernel(fold_wcat,
                      x_ref,
                      hw1_ref, hb1_ref, hg1_ref, hbe1_ref,
                      hw2_ref, hb2_ref, hg2_ref, hbe2_ref,
                      ww1_ref, wb1_ref, wg1_ref, wbe1_ref,
                      ww2_ref, wb2_ref, wg2_ref, wbe2_ref,
                      out_ref):
    tb, s, e = x_ref.shape
    m = tb * s
    mm = hw1_ref.dtype                                    # MXU operand dtype (bf16 or f32)

    # Cast x to the MXU dtype *inside* the kernel (no wrapper-side HBM round trip).
    # (TB, S, E) -> (M, E) is layout-trivial when S % 8 == 0; otherwise it still works
    # but costs a retiling copy per grid step.
    x2 = x_ref[...].reshape(m, e).astype(mm)

    # ---- h network (per-position MLP), flattened so the MXU M dimension is filled ----
    h1 = jnp.dot(x2, hw1_ref[...], preferred_element_type=jnp.float32) + hb1_ref[...]
    h1 = jnp.maximum(_layernorm_fused(h1, hg1_ref[...], hbe1_ref[...]), 0.0)
    hx = jnp.dot(h1.astype(mm), hw2_ref[...],
                 preferred_element_type=jnp.float32) + hb2_ref[...]
    hx = jnp.maximum(_layernorm_fused(hx, hg2_ref[...], hbe2_ref[...]), 0.0)       # (M, E) f32

    # ---- repeat/view/sum(dim=2) collapses to per-batch sum over seq minus self ----
    hx3 = hx.reshape(tb, s, e)
    compl = (jnp.sum(hx3, axis=1, keepdims=True) - hx3).reshape(m, e).astype(mm)   # (M, E)

    # ---- w network: concat(x, compl) as one deep-K matmul or two split matmuls ----
    if fold_wcat:
        # Single K=2E matmul: better MXU fill on v5e/v6e when E is well below native depth.
        xc = jnp.concatenate([x2, compl], axis=-1)                                 # (M, 2E)
        w1 = jnp.dot(xc, ww1_ref[...], preferred_element_type=jnp.float32) + wb1_ref[...]
    else:
        # Split accumulation: preferred on v7x where the MRB accumulates in place.
        w1 = (jnp.dot(x2, ww1_ref[0:e, :], preferred_element_type=jnp.float32)
              + jnp.dot(compl, ww1_ref[e:2 * e, :], preferred_element_type=jnp.float32)
              + wb1_ref[...])
    w1 = jnp.maximum(_layernorm_fused(w1, wg1_ref[...], wbe1_ref[...]), 0.0)        # (M, H)

    # ---- final Linear(H -> 1): VPU multiply + lane reduce (skip an N=1 MXU matmul) ----
    h_dim = w1.shape[-1]
    z = jnp.sum(w1.reshape(tb, s, h_dim) * ww2_ref[...].reshape(1, 1, h_dim), axis=-1)
    z = z + wb2_ref[...]                                                             # (TB, S)

    # LayerNorm over a single feature normalizes to exactly 0 (matches nn.LayerNorm(1)),
    # so the result reduces to relu(wbe2); computed generically for module fidelity.
    zn = (z - z) * jax.lax.rsqrt(jnp.zeros_like(z) + EPS)
    out_ref[...] = jnp.maximum(zn * wg2_ref[...] + wbe2_ref[...], 0.0)               # (TB, S)


def prepare_params(params, matmul_dtype=jnp.bfloat16):
    """Cast / reshape weights once per parameter set (hoisted out of the forward call)."""
    f32 = jnp.float32
    mm = matmul_dtype
    hidden = params["hw1"].shape[1]
    return (
        params["hw1"].astype(mm), params["hb1"].astype(f32),
        params["hg1"].astype(f32), params["hbe1"].astype(f32),
        params["hw2"].astype(mm), params["hb2"].astype(f32),
        params["hg2"].astype(f32), params["hbe2"].astype(f32),
        params["ww1"].astype(mm),
        params["wb1"].astype(f32), params["wg1"].astype(f32), params["wbe1"].astype(f32),
        params["ww2"].reshape(1, hidden).astype(f32),       # row vector for the VPU reduce
        params["wb2"].reshape(1, 1).astype(f32),
        params["wg2"].reshape(1, 1).astype(f32),
        params["wbe2"].reshape(1, 1).astype(f32),
    )


def _vmem_capacity_bytes():
    try:
        return int(pltpu.get_tpu_info().vmem_capacity_bytes)
    except Exception:
        return 64 * 1024 * 1024                              # v7x floor: be conservative


def _default_fold_wcat(embed):
    """Fold concat(x, compl) into one K=2E matmul?  v5e/v6e with small E benefit;
    v7x's MRB makes split accumulation nearly free, so keep the split there."""
    try:
        kind = jax.devices()[0].device_kind.lower()
    except Exception:
        kind = ""
    if "v7" in kind or "tpu7" in kind:
        return False
    if "v6" in kind:
        return embed < 256
    return embed < 128                                       # v5e / unknown


def _estimate_vmem_bytes(tb, seq, embed, hidden, x_itemsize, mm_itemsize,
                         weight_bytes, fold_wcat):
    """Per-step VMEM need: double-buffered x/out blocks, double-buffered (constant)
    weights, and in-flight f32/bf16 intermediates, plus 50% slack for compiler temps."""
    m = tb * seq
    io = 2 * (m * embed * x_itemsize) + 2 * (m * 4) + 2 * weight_bytes
    inter_f32 = 4 * m * (2 * hidden + 2 * embed)             # h1, hx, compl, w1
    inter_mm = mm_itemsize * m * (2 * embed + hidden)        # casts of x2, compl, h1
    if fold_wcat:
        inter_mm += mm_itemsize * m * 2 * embed              # concatenated (M, 2E) operand
    return io + int(1.5 * (inter_f32 + inter_mm))


def _pick_block_batch(batch, seq, embed, hidden, x_itemsize, mm_itemsize,
                      weight_bytes, fold_wcat, budget_bytes):
    """Pick TB: as large as the VMEM budget allows, sublane-legal for the (TB, S) output
    block (TB == batch or TB % 8 == 0), preferring >= 2 grid steps so the 'parallel'
    axis can feed both v7x TensorCores and the pipeline has something to overlap."""
    legal = [d for d in range(1, batch + 1)
             if batch % d == 0 and (d == batch or d % 8 == 0)]
    fits = [d for d in legal
            if _estimate_vmem_bytes(d, seq, embed, hidden, x_itemsize, mm_itemsize,
                                    weight_bytes, fold_wcat) <= budget_bytes]
    multi_step = [d for d in fits if d <= batch // 2]
    if multi_step:
        return max(multi_step)
    if fits:
        return max(fits)
    # TODO(synk): batches whose only legal divisor is `batch` itself (primes, 12, ...)
    # may still exceed the budget; splitting them would need a masked cdiv grid.
    return min(legal)


def deepaffine_forward(x, params, *, block_batch=None, matmul_dtype=jnp.bfloat16,
                       fold_wcat=None, single_buffer_weights=False):
    """DeepAffine eval-mode forward.  `params` may be the raw parameter dict or the tuple
    returned by prepare_params() (preferred for repeated calls: weights are cast once)."""
    batch, seq, embed = x.shape

    prepared = (prepare_params(params, matmul_dtype) if isinstance(params, dict)
                else tuple(params))
    mm = prepared[0].dtype
    hidden = prepared[0].shape[1]
    assert prepared[8].shape[0] == 2 * embed, "ww1 must have shape (2*embed, hidden)"

    weight_bytes = sum(int(a.size) * a.dtype.itemsize for a in prepared)
    x_itemsize = x.dtype.itemsize
    mm_itemsize = jnp.dtype(mm).itemsize

    if fold_wcat is None:
        fold_wcat = _default_fold_wcat(embed)

    cap = _vmem_capacity_bytes()
    budget = int(0.6 * cap)
    tb = (block_batch if block_batch is not None
          else _pick_block_batch(batch, seq, embed, hidden, x_itemsize, mm_itemsize,
                                 weight_bytes, fold_wcat, budget))
    assert batch % tb == 0, (batch, tb)
    grid = (batch // tb,)

    need = _estimate_vmem_bytes(tb, seq, embed, hidden, x_itemsize, mm_itemsize,
                                weight_bytes, fold_wcat)
    # Explicit scoped-VMEM limit: v5e defaults to 16 MiB (of 128), v7x has 64 MiB physical.
    vmem_limit = int(min(0.9 * cap, max(need + (8 << 20), 32 << 20)))

    def const_spec(arr):
        nd = arr.ndim
        if single_buffer_weights:
            # Constant index_map -> weights are DMA'd once; Buffered(1) drops the unused
            # second buffer.  Off by default for JAX-version portability; the doubled
            # footprint is accounted for in the VMEM budget either way.
            return pl.BlockSpec(arr.shape, lambda b, _nd=nd: (0,) * _nd,
                                pipeline_mode=pl.Buffered(1))
        return pl.BlockSpec(arr.shape, lambda b, _nd=nd: (0,) * _nd)

    in_specs = ([pl.BlockSpec((tb, seq, embed), lambda b: (b, 0, 0))]
                + [const_spec(a) for a in prepared])
    # Lane-dense (B, S) output slab; reshaped to (B, S, 1) below.
    out_specs = pl.BlockSpec((tb, seq), lambda b: (b, 0))

    out = pl.pallas_call(
        functools.partial(deepaffine_kernel, fold_wcat),
        out_shape=jax.ShapeDtypeStruct((batch, seq), jnp.float32),
        grid_spec=pltpu.PrefetchScalarGridSpec(
            num_scalar_prefetch=0,
            grid=grid,
            in_specs=in_specs,
            out_specs=out_specs,
        ),
        compiler_params=pltpu.CompilerParams(
            dimension_semantics=("parallel",),
            vmem_limit_bytes=vmem_limit),
    )(x, *prepared)

    return out.reshape(batch, seq, 1)


def init_params(key, embed_dim, hidden_dim):
    ks = jax.random.split(key, 16)
    f32 = jnp.float32

    def lin(kw, kb, fan_in, fan_out):
        bound = 1.0 / jnp.sqrt(fan_in)
        w = jax.random.uniform(kw, (fan_in, fan_out), f32, -bound, bound)
        b = jax.random.uniform(kb, (1, fan_out), f32, -bound, bound)
        return w, b

    hw1, hb1 = lin(ks[0], ks[1], embed_dim, hidden_dim)
    hw2, hb2 = lin(ks[2], ks[3], hidden_dim, embed_dim)
    ww1, wb1 = lin(ks[4], ks[5], 2 * embed_dim, hidden_dim)
    ww2, wb2 = lin(ks[6], ks[7], hidden_dim, 1)

    def ln(kg, kb, dim):
        g = 1.0 + 0.1 * jax.random.normal(kg, (1, dim), f32)
        b = 0.1 * jax.random.normal(kb, (1, dim), f32)
        return g, b

    hg1, hbe1 = ln(ks[8], ks[9], hidden_dim)
    hg2, hbe2 = ln(ks[10], ks[11], embed_dim)
    wg1, wbe1 = ln(ks[12], ks[13], hidden_dim)
    wg2, wbe2 = ln(ks[14], ks[15], 1)

    return dict(hw1=hw1, hb1=hb1, hg1=hg1, hbe1=hbe1,
                hw2=hw2, hb2=hb2, hg2=hg2, hbe2=hbe2,
                ww1=ww1, wb1=wb1, wg1=wg1, wbe1=wbe1,
                ww2=ww2, wb2=wb2, wg2=wg2, wbe2=wbe2)


def _layernorm_ref(x, gamma, beta):
    mean = jnp.mean(x, axis=-1, keepdims=True)
    var = jnp.mean((x - mean) ** 2, axis=-1, keepdims=True)
    return (x - mean) * jax.lax.rsqrt(var + EPS) * gamma + beta


def deepaffine_reference(x, p):
    """Pure-JAX reference mirroring the PyTorch forward (eval mode) literally."""
    def h(z):
        z1 = jnp.maximum(_layernorm_ref(z @ p["hw1"] + p["hb1"], p["hg1"], p["hbe1"]), 0.0)
        return jnp.maximum(_layernorm_ref(z1 @ p["hw2"] + p["hb2"], p["hg2"], p["hbe2"]), 0.0)

    def w(z):
        z1 = jnp.maximum(_layernorm_ref(z @ p["ww1"] + p["wb1"], p["wg1"], p["wbe1"]), 0.0)
        return jnp.maximum(_layernorm_ref(z1 @ p["ww2"] + p["wb2"], p["wg2"], p["wbe2"]), 0.0)

    B, S, E = x.shape
    compl_rep = jnp.tile(x, (1, S, 1))                        # x.repeat(1, S, 1)
    compl = h(compl_rep).reshape(B, S, S, -1).sum(axis=2)     # .view(...).sum(dim=2)
    compl = compl - h(x)
    return w(jnp.concatenate([x, compl], axis=2))


if __name__ == "__main__":
    def run_check(key, batch, seq, embed_dim, hidden_dim, matmul_dtype, fold_wcat, atol):
        kx, kp = jax.random.split(key)
        x = jax.random.normal(kx, (batch, seq, embed_dim), jnp.float32)
        params = init_params(kp, embed_dim, hidden_dim)
        prepared = prepare_params(params, matmul_dtype=matmul_dtype)   # hoisted weight cast
        out = jax.block_until_ready(deepaffine_forward(x, prepared, fold_wcat=fold_wcat))
        ref = deepaffine_reference(x, params)
        assert out.shape == (batch, seq, 1), out.shape
        err = jnp.max(jnp.abs(out - ref))
        assert jnp.allclose(out, ref, atol=atol, rtol=atol), f"max abs err {err}"

    k0, k1 = jax.random.split(jax.random.PRNGKey(0))
    # Strict f32 parity path (auto chip-dependent concat handling).
    run_check(k0, batch=2, seq=8, embed_dim=32, hidden_dim=64,
              matmul_dtype=jnp.float32, fold_wcat=None, atol=1e-4)
    # Default bf16 MXU path; exercise both concat-handling code paths explicitly.
    # (The module's final LayerNorm(1) makes the output exactly relu(wbe2), so the f32
    # tolerance still holds with bf16 matmul operands.)
    run_check(k1, batch=4, seq=16, embed_dim=32, hidden_dim=64,
              matmul_dtype=jnp.bfloat16, fold_wcat=True, atol=1e-4)
    run_check(k1, batch=4, seq=16, embed_dim=32, hidden_dim=64,
              matmul_dtype=jnp.bfloat16, fold_wcat=False, atol=1e-4)
    print("KERNEL_OK")
</pallas_src>

<mosaic_0001>
module attributes {stable_mosaic.version = 11 : i64} {
  func.func @deepaffine_kernel(%arg0: i32, %arg1: memref<2x8x32xf32, #tpu.memory_space<vmem>>, %arg2: memref<32x64xf32, #tpu.memory_space<vmem>>, %arg3: memref<1x64xf32, #tpu.memory_space<vmem>>, %arg4: memref<1x64xf32, #tpu.memory_space<vmem>>, %arg5: memref<1x64xf32, #tpu.memory_space<vmem>>, %arg6: memref<64x32xf32, #tpu.memory_space<vmem>>, %arg7: memref<1x32xf32, #tpu.memory_space<vmem>>, %arg8: memref<1x32xf32, #tpu.memory_space<vmem>>, %arg9: memref<1x32xf32, #tpu.memory_space<vmem>>, %arg10: memref<64x64xf32, #tpu.memory_space<vmem>>, %arg11: memref<1x64xf32, #tpu.memory_space<vmem>>, %arg12: memref<1x64xf32, #tpu.memory_space<vmem>>, %arg13: memref<1x64xf32, #tpu.memory_space<vmem>>, %arg14: memref<1x64xf32, #tpu.memory_space<vmem>>, %arg15: memref<1x1xf32, #tpu.memory_space<vmem>>, %arg16: memref<1x1xf32, #tpu.memory_space<vmem>>, %arg17: memref<1x1xf32, #tpu.memory_space<vmem>>, %arg18: memref<2x8xf32, #tpu.memory_space<vmem>>) attributes {dimension_semantics = [#tpu.dimension_semantics<parallel>], iteration_bounds = array<i64: 1>, scalar_prefetch = 0 : i64, scratch_operands = 0 : i64, tpu.core_type = #tpu.core_type<tc>, window_params = [{transform_indices = @transform_0, window_bounds = array<i64: 2, 8, 32>}, {pipeline_mode = #tpu.pipeline_mode<synchronous>, transform_indices = @transform_1, window_bounds = array<i64: 32, 64>}, {pipeline_mode = #tpu.pipeline_mode<synchronous>, transform_indices = @transform_2, window_bounds = array<i64: 1, 64>}, {pipeline_mode = #tpu.pipeline_mode<synchronous>, transform_indices = @transform_3, window_bounds = array<i64: 1, 64>}, {pipeline_mode = #tpu.pipeline_mode<synchronous>, transform_indices = @transform_4, window_bounds = array<i64: 1, 64>}, {pipeline_mode = #tpu.pipeline_mode<synchronous>, transform_indices = @transform_5, window_bounds = array<i64: 64, 32>}, {pipeline_mode = #tpu.pipeline_mode<synchronous>, transform_indices = @transform_6, window_bounds = array<i64: 1, 32>}, {pipeline_mode = #tpu.pipeline_mode<synchronous>, transform_indices = @transform_7, window_bounds = array<i64: 1, 32>}, {pipeline_mode = #tpu.pipeline_mode<synchronous>, transform_indices = @transform_8, window_bounds = array<i64: 1, 32>}, {pipeline_mode = #tpu.pipeline_mode<synchronous>, transform_indices = @transform_9, window_bounds = array<i64: 64, 64>}, {pipeline_mode = #tpu.pipeline_mode<synchronous>, transform_indices = @transform_10, window_bounds = array<i64: 1, 64>}, {pipeline_mode = #tpu.pipeline_mode<synchronous>, transform_indices = @transform_11, window_bounds = array<i64: 1, 64>}, {pipeline_mode = #tpu.pipeline_mode<synchronous>, transform_indices = @transform_12, window_bounds = array<i64: 1, 64>}, {pipeline_mode = #tpu.pipeline_mode<synchronous>, transform_indices = @transform_13, window_bounds = array<i64: 1, 64>}, {pipeline_mode = #tpu.pipeline_mode<synchronous>, transform_indices = @transform_14, window_bounds = array<i64: 1, 1>}, {pipeline_mode = #tpu.pipeline_mode<synchronous>, transform_indices = @transform_15, window_bounds = array<i64: 1, 1>}, {pipeline_mode = #tpu.pipeline_mode<synchronous>, transform_indices = @transform_16, window_bounds = array<i64: 1, 1>}, {transform_indices = @transform_17, window_bounds = array<i64: 2, 8>}]} {
    %c0 = arith.constant 0 : index
    %c0_0 = arith.constant 0 : index
    %c0_1 = arith.constant 0 : index
    %0 = vector.load %arg1[%c0, %c0_0, %c0_1] : memref<2x8x32xf32, #tpu.memory_space<vmem>>, vector<2x8x32xf32>
    %1 = vector.shape_cast %0 : vector<2x8x32xf32> to vector<16x32xf32>
    %c0_2 = arith.constant 0 : index
    %c0_3 = arith.constant 0 : index
    %2 = vector.load %arg2[%c0_2, %c0_3] : memref<32x64xf32, #tpu.memory_space<vmem>>, vector<32x64xf32>
    %cst = arith.constant dense<0.000000e+00> : vector<16x64xf32>
    %3 = tpu.matmul %1, %2, %cst {dimension_numbers = #tpu.dot_dimension_numbers<[1], [0], [0], [1], [0, 0, 1, 1], [], []>} : vector<16x32xf32>, vector<32x64xf32>, vector<16x64xf32> -> vector<16x64xf32>
    %c0_4 = arith.constant 0 : index
    %c0_5 = arith.constant 0 : index
    %4 = vector.load %arg3[%c0_4, %c0_5] : memref<1x64xf32, #tpu.memory_space<vmem>>, vector<1x64xf32>
    %5 = vector.broadcast %4 : vector<1x64xf32> to vector<16x64xf32>
    %6 = arith.addf %3, %5 : vector<16x64xf32>
    %c0_6 = arith.constant 0 : index
    %c0_7 = arith.constant 0 : index
    %7 = vector.load %arg4[%c0_6, %c0_7] : memref<1x64xf32, #tpu.memory_space<vmem>>, vector<1x64xf32>
    %c0_8 = arith.constant 0 : index
    %c0_9 = arith.constant 0 : index
    %8 = vector.load %arg5[%c0_8, %c0_9] : memref<1x64xf32, #tpu.memory_space<vmem>>, vector<1x64xf32>
    %cst_10 = arith.constant dense<0.000000e+00> : vector<16xf32>
    %9 = vector.multi_reduction <add>, %6, %cst_10 [1] : vector<16x64xf32> to vector<16xf32>
    %10 = vector.shape_cast %9 : vector<16xf32> to vector<16x1xf32>
    %cst_11 = arith.constant 6.400000e+01 : f32
    %11 = vector.broadcast %cst_11 : f32 to vector<16x1xf32>
    %12 = arith.divf %10, %11 : vector<16x1xf32>
    %13 = arith.mulf %6, %6 : vector<16x64xf32>
    %cst_12 = arith.constant dense<0.000000e+00> : vector<16xf32>
    %14 = vector.multi_reduction <add>, %13, %cst_12 [1] : vector<16x64xf32> to vector<16xf32>
    %15 = vector.shape_cast %14 : vector<16xf32> to vector<16x1xf32>
    %cst_13 = arith.constant 6.400000e+01 : f32
    %16 = vector.broadcast %cst_13 : f32 to vector<16x1xf32>
    %17 = arith.divf %15, %16 : vector<16x1xf32>
    %18 = arith.mulf %12, %12 : vector<16x1xf32>
    %19 = arith.subf %17, %18 : vector<16x1xf32>
    %cst_14 = arith.constant 0.000000e+00 : f32
    %20 = vector.broadcast %cst_14 : f32 to vector<16x1xf32>
    %21 = arith.maximumf %19, %20 : vector<16x1xf32>
    %22 = vector.broadcast %12 : vector<16x1xf32> to vector<16x64xf32>
    %23 = arith.subf %6, %22 : vector<16x64xf32>
    %cst_15 = arith.constant 9.99999974E-6 : f32
    %24 = vector.broadcast %cst_15 : f32 to vector<16x1xf32>
    %25 = arith.addf %21, %24 : vector<16x1xf32>
    %26 = math.rsqrt %25 : vector<16x1xf32>
    %27 = vector.broadcast %26 : vector<16x1xf32> to vector<16x64xf32>
    %28 = arith.mulf %23, %27 : vector<16x64xf32>
    %29 = vector.broadcast %7 : vector<1x64xf32> to vector<16x64xf32>
    %30 = arith.mulf %28, %29 : vector<16x64xf32>
    %31 = vector.broadcast %8 : vector<1x64xf32> to vector<16x64xf32>
    %32 = arith.addf %30, %31 : vector<16x64xf32>
    %cst_16 = arith.constant 0.000000e+00 : f32
    %33 = vector.broadcast %cst_16 : f32 to vector<16x64xf32>
    %34 = arith.maximumf %32, %33 : vector<16x64xf32>
    %c0_17 = arith.constant 0 : index
    %c0_18 = arith.constant 0 : index
    %35 = vector.load %arg6[%c0_17, %c0_18] : memref<64x32xf32, #tpu.memory_space<vmem>>, vector<64x32xf32>
    %cst_19 = arith.constant dense<0.000000e+00> : vector<16x32xf32>
    %36 = tpu.matmul %34, %35, %cst_19 {dimension_numbers = #tpu.dot_dimension_numbers<[1], [0], [0], [1], [0, 0, 1, 1], [], []>} : vector<16x64xf32>, vector<64x32xf32>, vector<16x32xf32> -> vector<16x32xf32>
    %c0_20 = arith.constant 0 : index
    %c0_21 = arith.constant 0 : index
    %37 = vector.load %arg7[%c0_20, %c0_21] : memref<1x32xf32, #tpu.memory_space<vmem>>, vector<1x32xf32>
    %38 = vector.broadcast %37 : vector<1x32xf32> to vector<16x32xf32>
    %39 = arith.addf %36, %38 : vector<16x32xf32>
    %c0_22 = arith.constant 0 : index
    %c0_23 = arith.constant 0 : index
    %40 = vector.load %arg8[%c0_22, %c0_23] : memref<1x32xf32, #tpu.memory_space<vmem>>, vector<1x32xf32>
    %c0_24 = arith.constant 0 : index
    %c0_25 = arith.constant 0 : index
    %41 = vector.load %arg9[%c0_24, %c0_25] : memref<1x32xf32, #tpu.memory_space<vmem>>, vector<1x32xf32>
    %cst_26 = arith.constant dense<0.000000e+00> : vector<16xf32>
    %42 = vector.multi_reduction <add>, %39, %cst_26 [1] : vector<16x32xf32> to vector<16xf32>
    %43 = vector.shape_cast %42 : vector<16xf32> to vector<16x1xf32>
    %cst_27 = arith.constant 3.200000e+01 : f32
    %44 = vector.broadcast %cst_27 : f32 to vector<16x1xf32>
    %45 = arith.divf %43, %44 : vector<16x1xf32>
    %46 = arith.mulf %39, %39 : vector<16x32xf32>
    %cst_28 = arith.constant dense<0.000000e+00> : vector<16xf32>
    %47 = vector.multi_reduction <add>, %46, %cst_28 [1] : vector<16x32xf32> to vector<16xf32>
    %48 = vector.shape_cast %47 : vector<16xf32> to vector<16x1xf32>
    %cst_29 = arith.constant 3.200000e+01 : f32
    %49 = vector.broadcast %cst_29 : f32 to vector<16x1xf32>
    %50 = arith.divf %48, %49 : vector<16x1xf32>
    %51 = arith.mulf %45, %45 : vector<16x1xf32>
    %52 = arith.subf %50, %51 : vector<16x1xf32>
    %cst_30 = arith.constant 0.000000e+00 : f32
    %53 = vector.broadcast %cst_30 : f32 to vector<16x1xf32>
    %54 = arith.maximumf %52, %53 : vector<16x1xf32>
    %55 = vector.broadcast %45 : vector<16x1xf32> to vector<16x32xf32>
    %56 = arith.subf %39, %55 : vector<16x32xf32>
    %cst_31 = arith.constant 9.99999974E-6 : f32
    %57 = vector.broadcast %cst_31 : f32 to vector<16x1xf32>
    %58 = arith.addf %54, %57 : vector<16x1xf32>
    %59 = math.rsqrt %58 : vector<16x1xf32>
    %60 = vector.broadcast %59 : vector<16x1xf32> to vector<16x32xf32>
    %61 = arith.mulf %56, %60 : vector<16x32xf32>
    %62 = vector.broadcast %40 : vector<1x32xf32> to vector<16x32xf32>
    %63 = arith.mulf %61, %62 : vector<16x32xf32>
    %64 = vector.broadcast %41 : vector<1x32xf32> to vector<16x32xf32>
    %65 = arith.addf %63, %64 : vector<16x32xf32>
    %cst_32 = arith.constant 0.000000e+00 : f32
    %66 = vector.broadcast %cst_32 : f32 to vector<16x32xf32>
    %67 = arith.maximumf %65, %66 : vector<16x32xf32>
    %68 = vector.shape_cast %67 : vector<16x32xf32> to vector<2x8x32xf32>
    %cst_33 = arith.constant dense<0.000000e+00> : vector<2x32xf32>
    %69 = vector.multi_reduction <add>, %68, %cst_33 [1] : vector<2x8x32xf32> to vector<2x32xf32>
    %70 = vector.shape_cast %69 : vector<2x32xf32> to vector<2x1x32xf32>
    %71 = vector.broadcast %70 : vector<2x1x32xf32> to vector<2x8x32xf32>
    %72 = arith.subf %71, %68 : vector<2x8x32xf32>
    %73 = vector.shape_cast %72 : vector<2x8x32xf32> to vector<16x32xf32>
    %74 = tpu.concatenate %1, %73 in 1 : vector<16x32xf32>, vector<16x32xf32> -> vector<16x64xf32>
    %c0_34 = arith.constant 0 : index
    %c0_35 = arith.constant 0 : index
    %75 = vector.load %arg10[%c0_34, %c0_35] : memref<64x64xf32, #tpu.memory_space<vmem>>, vector<64x64xf32>
    %cst_36 = arith.constant dense<0.000000e+00> : vector<16x64xf32>
    %76 = tpu.matmul %74, %75, %cst_36 {dimension_numbers = #tpu.dot_dimension_numbers<[1], [0], [0], [1], [0, 0, 1, 1], [], []>} : vector<16x64xf32>, vector<64x64xf32>, vector<16x64xf32> -> vector<16x64xf32>
    %c0_37 = arith.constant 0 : index
    %c0_38 = arith.constant 0 : index
    %77 = vector.load %arg11[%c0_37, %c0_38] : memref<1x64xf32, #tpu.memory_space<vmem>>, vector<1x64xf32>
    %78 = vector.broadcast %77 : vector<1x64xf32> to vector<16x64xf32>
    %79 = arith.addf %76, %78 : vector<16x64xf32>
    %c0_39 = arith.constant 0 : index
    %c0_40 = arith.constant 0 : index
    %80 = vector.load %arg12[%c0_39, %c0_40] : memref<1x64xf32, #tpu.memory_space<vmem>>, vector<1x64xf32>
    %c0_41 = arith.constant 0 : index
    %c0_42 = arith.constant 0 : index
    %81 = vector.load %arg13[%c0_41, %c0_42] : memref<1x64xf32, #tpu.memory_space<vmem>>, vector<1x64xf32>
    %cst_43 = arith.constant dense<0.000000e+00> : vector<16xf32>
    %82 = vector.multi_reduction <add>, %79, %cst_43 [1] : vector<16x64xf32> to vector<16xf32>
    %83 = vector.shape_cast %82 : vector<16xf32> to vector<16x1xf32>
    %cst_44 = arith.constant 6.400000e+01 : f32
    %84 = vector.broadcast %cst_44 : f32 to vector<16x1xf32>
    %85 = arith.divf %83, %84 : vector<16x1xf32>
    %86 = arith.mulf %79, %79 : vector<16x64xf32>
    %cst_45 = arith.constant dense<0.000000e+00> : vector<16xf32>
    %87 = vector.multi_reduction <add>, %86, %cst_45 [1] : vector<16x64xf32> to vector<16xf32>
    %88 = vector.shape_cast %87 : vector<16xf32> to vector<16x1xf32>
    %cst_46 = arith.constant 6.400000e+01 : f32
    %89 = vector.broadcast %cst_46 : f32 to vector<16x1xf32>
    %90 = arith.divf %88, %89 : vector<16x1xf32>
    %91 = arith.mulf %85, %85 : vector<16x1xf32>
    %92 = arith.subf %90, %91 : vector<16x1xf32>
    %cst_47 = arith.constant 0.000000e+00 : f32
    %93 = vector.broadcast %cst_47 : f32 to vector<16x1xf32>
    %94 = arith.maximumf %92, %93 : vector<16x1xf32>
    %95 = vector.broadcast %85 : vector<16x1xf32> to vector<16x64xf32>
    %96 = arith.subf %79, %95 : vector<16x64xf32>
    %cst_48 = arith.constant 9.99999974E-6 : f32
    %97 = vector.broadcast %cst_48 : f32 to vector<16x1xf32>
    %98 = arith.addf %94, %97 : vector<16x1xf32>
    %99 = math.rsqrt %98 : vector<16x1xf32>
    %100 = vector.broadcast %99 : vector<16x1xf32> to vector<16x64xf32>
    %101 = arith.mulf %96, %100 : vector<16x64xf32>
    %102 = vector.broadcast %80 : vector<1x64xf32> to vector<16x64xf32>
    %103 = arith.mulf %101, %102 : vector<16x64xf32>
    %104 = vector.broadcast %81 : vector<1x64xf32> to vector<16x64xf32>
    %105 = arith.addf %103, %104 : vector<16x64xf32>
    %cst_49 = arith.constant 0.000000e+00 : f32
    %106 = vector.broadcast %cst_49 : f32 to vector<16x64xf32>
    %107 = arith.maximumf %105, %106 : vector<16x64xf32>
    %108 = vector.shape_cast %107 : vector<16x64xf32> to vector<2x8x64xf32>
    %c0_50 = arith.constant 0 : index
    %c0_51 = arith.constant 0 : index
    %109 = vector.load %arg14[%c0_50, %c0_51] : memref<1x64xf32, #tpu.memory_space<vmem>>, vector<1x64xf32>
    %110 = vector.shape_cast %109 : vector<1x64xf32> to vector<1x1x64xf32>
    %111 = vector.broadcast %110 : vector<1x1x64xf32> to vector<2x8x64xf32>
    %112 = arith.mulf %108, %111 : vector<2x8x64xf32>
    %cst_52 = arith.constant dense<0.000000e+00> : vector<2x8xf32>
    %113 = vector.multi_reduction <add>, %112, %cst_52 [2] : vector<2x8x64xf32> to vector<2x8xf32>
    %c0_53 = arith.constant 0 : index
    %c0_54 = arith.constant 0 : index
    %114 = vector.load %arg15[%c0_53, %c0_54] : memref<1x1xf32, #tpu.memory_space<vmem>>, vector<1x1xf32>
    %115 = vector.broadcast %114 : vector<1x1xf32> to vector<2x8xf32>
    %116 = arith.addf %113, %115 : vector<2x8xf32>
    %117 = arith.subf %116, %116 : vector<2x8xf32>
    %cst_55 = arith.constant 0.000000e+00 : f32
    %118 = vector.broadcast %cst_55 : f32 to vector<2x8xf32>
    %cst_56 = arith.constant 9.99999974E-6 : f32
    %119 = vector.broadcast %cst_56 : f32 to vector<2x8xf32>
    %120 = arith.addf %118, %119 : vector<2x8xf32>
    %121 = math.rsqrt %120 : vector<2x8xf32>
    %122 = arith.mulf %117, %121 : vector<2x8xf32>
    %c0_57 = arith.constant 0 : index
    %c0_58 = arith.constant 0 : index
    %123 = vector.load %arg16[%c0_57, %c0_58] : memref<1x1xf32, #tpu.memory_space<vmem>>, vector<1x1xf32>
    %124 = vector.broadcast %123 : vector<1x1xf32> to vector<2x8xf32>
    %125 = arith.mulf %122, %124 : vector<2x8xf32>
    %c0_59 = arith.constant 0 : index
    %c0_60 = arith.constant 0 : index
    %126 = vector.load %arg17[%c0_59, %c0_60] : memref<1x1xf32, #tpu.memory_space<vmem>>, vector<1x1xf32>
    %127 = vector.broadcast %126 : vector<1x1xf32> to vector<2x8xf32>
    %128 = arith.addf %125, %127 : vector<2x8xf32>
    %cst_61 = arith.constant 0.000000e+00 : f32
    %129 = vector.broadcast %cst_61 : f32 to vector<2x8xf32>
    %130 = arith.maximumf %128, %129 : vector<2x8xf32>
    %c0_62 = arith.constant 0 : index
    %c0_63 = arith.constant 0 : index
    %131 = vector.load %arg18[%c0_62, %c0_63] : memref<2x8xf32, #tpu.memory_space<vmem>>, vector<2x8xf32>
    tpu.vector_store %arg18[%c0_62, %c0_63], %130 {strides = array<i32>} : memref<2x8xf32, #tpu.memory_space<vmem>>, vector<2x8xf32>,
    return
  }
  func.func @transform_0(%arg0: i32) -> (i32, i32, i32) {
    %c0_i32 = arith.constant 0 : i32
    %c0_i32_0 = arith.constant 0 : i32
    %c0_i32_1 = arith.constant 0 : i32
    return %arg0, %c0_i32, %c0_i32_0 : i32, i32, i32
  }
  func.func @transform_1(%arg0: i32) -> (i32, i32) {
    %c0_i32 = arith.constant 0 : i32
    %c0_i32_0 = arith.constant 0 : i32
    %c0_i32_1 = arith.constant 0 : i32
    return %c0_i32, %c0_i32_0 : i32, i32
  }
  func.func @transform_2(%arg0: i32) -> (i32, i32) {
    %c0_i32 = arith.constant 0 : i32
    %c0_i32_0 = arith.constant 0 : i32
    %c0_i32_1 = arith.constant 0 : i32
    return %c0_i32, %c0_i32_0 : i32, i32
  }
  func.func @transform_3(%arg0: i32) -> (i32, i32) {
    %c0_i32 = arith.constant 0 : i32
    %c0_i32_0 = arith.constant 0 : i32
    %c0_i32_1 = arith.constant 0 : i32
    return %c0_i32, %c0_i32_0 : i32, i32
  }
  func.func @transform_4(%arg0: i32) -> (i32, i32) {
    %c0_i32 = arith.constant 0 : i32
    %c0_i32_0 = arith.constant 0 : i32
    %c0_i32_1 = arith.constant 0 : i32
    return %c0_i32, %c0_i32_0 : i32, i32
  }
  func.func @transform_5(%arg0: i32) -> (i32, i32) {
    %c0_i32 = arith.constant 0 : i32
    %c0_i32_0 = arith.constant 0 : i32
    %c0_i32_1 = arith.constant 0 : i32
    return %c0_i32, %c0_i32_0 : i32, i32
  }
  func.func @transform_6(%arg0: i32) -> (i32, i32) {
    %c0_i32 = arith.constant 0 : i32
    %c0_i32_0 = arith.constant 0 : i32
    %c0_i32_1 = arith.constant 0 : i32
    return %c0_i32, %c0_i32_0 : i32, i32
  }
  func.func @transform_7(%arg0: i32) -> (i32, i32) {
    %c0_i32 = arith.constant 0 : i32
    %c0_i32_0 = arith.constant 0 : i32
    %c0_i32_1 = arith.constant 0 : i32
    return %c0_i32, %c0_i32_0 : i32, i32
  }
  func.func @transform_8(%arg0: i32) -> (i32, i32) {
    %c0_i32 = arith.constant 0 : i32
    %c0_i32_0 = arith.constant 0 : i32
    %c0_i32_1 = arith.constant 0 : i32
    return %c0_i32, %c0_i32_0 : i32, i32
  }
  func.func @transform_9(%arg0: i32) -> (i32, i32) {
    %c0_i32 = arith.constant 0 : i32
    %c0_i32_0 = arith.constant 0 : i32
    %c0_i32_1 = arith.constant 0 : i32
    return %c0_i32, %c0_i32_0 : i32, i32
  }
  func.func @transform_10(%arg0: i32) -> (i32, i32) {
    %c0_i32 = arith.constant 0 : i32
    %c0_i32_0 = arith.constant 0 : i32
    %c0_i32_1 = arith.constant 0 : i32
    return %c0_i32, %c0_i32_0 : i32, i32
  }
  func.func @transform_11(%arg0: i32) -> (i32, i32) {
    %c0_i32 = arith.constant 0 : i32
    %c0_i32_0 = arith.constant 0 : i32
    %c0_i32_1 = arith.constant 0 : i32
    return %c0_i32, %c0_i32_0 : i32, i32
  }
  func.func @transform_12(%arg0: i32) -> (i32, i32) {
    %c0_i32 = arith.constant 0 : i32
    %c0_i32_0 = arith.constant 0 : i32
    %c0_i32_1 = arith.constant 0 : i32
    return %c0_i32, %c0_i32_0 : i32, i32
  }
  func.func @transform_13(%arg0: i32) -> (i32, i32) {
    %c0_i32 = arith.constant 0 : i32
    %c0_i32_0 = arith.constant 0 : i32
    %c0_i32_1 = arith.constant 0 : i32
    return %c0_i32, %c0_i32_0 : i32, i32
  }
  func.func @transform_14(%arg0: i32) -> (i32, i32) {
    %c0_i32 = arith.constant 0 : i32
    %c0_i32_0 = arith.constant 0 : i32
    %c0_i32_1 = arith.constant 0 : i32
    return %c0_i32, %c0_i32_0 : i32, i32
  }
  func.func @transform_15(%arg0: i32) -> (i32, i32) {
    %c0_i32 = arith.constant 0 : i32
    %c0_i32_0 = arith.constant 0 : i32
    %c0_i32_1 = arith.constant 0 : i32
    return %c0_i32, %c0_i32_0 : i32, i32
  }
  func.func @transform_16(%arg0: i32) -> (i32, i32) {
    %c0_i32 = arith.constant 0 : i32
    %c0_i32_0 = arith.constant 0 : i32
    %c0_i32_1 = arith.constant 0 : i32
    return %c0_i32, %c0_i32_0 : i32, i32
  }
  func.func @transform_17(%arg0: i32) -> (i32, i32) {
    %c0_i32 = arith.constant 0 : i32
    %c0_i32_0 = arith.constant 0 : i32
    return %arg0, %c0_i32 : i32, i32
  }
}

</mosaic_0001>

<llo_original>
// kernel: tpu_custom_call.1
$region0: #{tpu_custom_call.1}
  #allocation0 [shape = 'u32[]', space=smem, size = 0x4, offset = 0x4, fixed_abs, tag = 'smem constant byte address 0x4 - core index']
  #allocation1 [shape = 'u32[72,128]{1,0:T(1,128)}', space=vmem, size = 0x9000, scoped, tag = 'internal scratch']
  #allocation2 [shape = 'f32[1,1]{1,0:T(1,128)S(1)}', space=vmem, size = 0x200, scoped, tag = 'scoped memory for tpu_custom_call.1']
  #allocation3 [shape = 'f32[1,1]{1,0:T(1,128)S(1)}', space=vmem, size = 0x200, scoped, tag = 'scoped memory for tpu_custom_call.1']
  #allocation4 [shape = 'f32[1,1]{1,0:T(1,128)S(1)}', space=vmem, size = 0x200, scoped, tag = 'scoped memory for tpu_custom_call.1']
  %s0 = inlined_call_operand.hbm [shape: f32[2,8,32], index: 0, kind: input, shape index: {}]
  %s1 = inlined_call_operand.vmem [shape: f32[32,64], index: 1, kind: input, shape index: {}]
  %s2 = inlined_call_operand.vmem [shape: f32[1,64], index: 2, kind: input, shape index: {}]
  %s3 = inlined_call_operand.vmem [shape: f32[1,64], index: 3, kind: input, shape index: {}]
  %s4 = inlined_call_operand.vmem [shape: f32[1,64], index: 4, kind: input, shape index: {}]
  %s5 = inlined_call_operand.vmem [shape: f32[64,32], index: 5, kind: input, shape index: {}]
  %s6 = inlined_call_operand.vmem [shape: f32[1,32], index: 6, kind: input, shape index: {}]
  %s7 = inlined_call_operand.vmem [shape: f32[1,32], index: 7, kind: input, shape index: {}]
  %s8 = inlined_call_operand.vmem [shape: f32[1,32], index: 8, kind: input, shape index: {}]
  %s9 = inlined_call_operand.vmem [shape: f32[64,64], index: 9, kind: input, shape index: {}]
  %s10 = inlined_call_operand.vmem [shape: f32[1,64], index: 10, kind: input, shape index: {}]
  %s11 = inlined_call_operand.vmem [shape: f32[1,64], index: 11, kind: input, shape index: {}]
  %s12 = inlined_call_operand.vmem [shape: f32[1,64], index: 12, kind: input, shape index: {}]
  %s13 = inlined_call_operand.vmem [shape: f32[1,64], index: 13, kind: input, shape index: {}]
  %s14 = inlined_call_operand.<no memory space> [shape: f32[1,1], index: 14, kind: input, shape index: {}]
  %s15 = inlined_call_operand.<no memory space> [shape: f32[1,1], index: 15, kind: input, shape index: {}]
  %s16 = inlined_call_operand.<no memory space> [shape: f32[1,1], index: 16, kind: input, shape index: {}]
  %s17 = inlined_call_operand.hbm [shape: f32[2,8], index: 17, kind: output, shape index: {}]
  %s18 = sld [smem:[#allocation0]]
  $region82: #{tpu_custom_call.1} parent=0
    _
  %s20 = ssub.s32 1, %s18
  %s21 = scalar_select 0, %s20, %s18
  %v22 = vstv %s14
  %23 = vst [vmem:[#allocation2] sm:$0x1] %v22
  %v24 = vstv %s15
  %25 = vst [vmem:[#allocation3] sm:$0x1] %v24
  %v26 = vstv %s16
  %27 = vst [vmem:[#allocation4] sm:$0x1] %v26
  $region1: #{tpu_custom_call.1} parent=0
    #allocation5 [shape = 'u8[8192]{0}', space=vmem, size = 0x2000, scoped, tag = 'input window, operand 0, single buffered']
    #allocation6 [shape = 's32[1]{0}', space=sflag, size = 0x4, scoped, tag = 'scoped memory for tpu_custom_call.1']
    #allocation7 [shape = 's32[1]{0}', space=sflag, size = 0x4, scoped, tag = 'scoped memory for tpu_custom_call.1']
    #allocation8 [shape = 'u8[1024]{0}', space=vmem, size = 0x400, scoped, tag = 'output window, operand 0, single buffered']
    %28 = vsyncpa [#allocation6], 0
    %29 = vsyncpa [#allocation7], 0
    // Predicated region
    $region2: #{tpu_custom_call.1} parent=1 // pred_check
      _
    $region3: #{tpu_custom_call.1} parent=1 // pred_check_branch
      %31 = sbr.rel (0) target = $region5
    $region4: #{tpu_custom_call.1} parent=1 // pred_region
      %33 = vsyncadd [#allocation6], 0
      %s34 = sshll.u32 %s0, 4
      %s35 = int_to_ptr.hbm [resolvable:$true] %s34
      %s36 = sshll.u32 [#allocation5], 4
      %s37 = int_to_ptr.vmem [resolvable:$true] %s36
      %42 = dma.hbm_to_vmem [thread:$0]  %s35, 256, %s37, [#allocation6], 128, 128, 8
    $region5: #{tpu_custom_call.1} parent=1 // pred_fallthru
      _
    // Predicated region
    $region6: #{tpu_custom_call.1} parent=1 // pred_check
      _
    $region7: #{tpu_custom_call.1} parent=1 // pred_check_branch
      %44 = sbr.rel (0) target = $region9
    $region8: #{tpu_custom_call.1} parent=1 // pred_region
      _
    $region9: #{tpu_custom_call.1} parent=1 // pred_fallthru
      _
    // Predicated region
    $region10: #{tpu_custom_call.1} parent=1 // pred_check
      _
    $region11: #{tpu_custom_call.1} parent=1 // pred_check_branch
      %46 = sbr.rel (0) target = $region13
    $region12: #{tpu_custom_call.1} parent=1 // pred_region
      _
    $region13: #{tpu_custom_call.1} parent=1 // pred_fallthru
      _
    // Predicated region
    $region14: #{tpu_custom_call.1} parent=1 // pred_check
      _
    $region15: #{tpu_custom_call.1} parent=1 // pred_check_branch
      %48 = sbr.rel (0) target = $region17
    $region16: #{tpu_custom_call.1} parent=1 // pred_region
      _
    $region17: #{tpu_custom_call.1} parent=1 // pred_fallthru
      _
    // Predicated region
    $region18: #{tpu_custom_call.1} parent=1 // pred_check
      _
    $region19: #{tpu_custom_call.1} parent=1 // pred_check_branch
      %50 = sbr.rel (0) target = $region21
    $region20: #{tpu_custom_call.1} parent=1 // pred_region
      _
    $region21: #{tpu_custom_call.1} parent=1 // pred_fallthru
      _
    // Predicated region
    $region22: #{tpu_custom_call.1} parent=1 // pred_check
      _
    $region23: #{tpu_custom_call.1} parent=1 // pred_check_branch
      %52 = sbr.rel (0) target = $region25
    $region24: #{tpu_custom_call.1} parent=1 // pred_region
      _
    $region25: #{tpu_custom_call.1} parent=1 // pred_fallthru
      _
    // Predicated region
    $region26: #{tpu_custom_call.1} parent=1 // pred_check
      _
    $region27: #{tpu_custom_call.1} parent=1 // pred_check_branch
      %54 = sbr.rel (0) target = $region29
    $region28: #{tpu_custom_call.1} parent=1 // pred_region
      _
    $region29: #{tpu_custom_call.1} parent=1 // pred_fallthru
      _
    // Predicated region
    $region30: #{tpu_custom_call.1} parent=1 // pred_check
      _
    $region31: #{tpu_custom_call.1} parent=1 // pred_check_branch
      %56 = sbr.rel (0) target = $region33
    $region32: #{tpu_custom_call.1} parent=1 // pred_region
      _
    $region33: #{tpu_custom_call.1} parent=1 // pred_fallthru
      _
    // Predicated region
    $region34: #{tpu_custom_call.1} parent=1 // pred_check
      _
    $region35: #{tpu_custom_call.1} parent=1 // pred_check_branch
      %58 = sbr.rel (0) target = $region37
    $region36: #{tpu_custom_call.1} parent=1 // pred_region
      _
    $region37: #{tpu_custom_call.1} parent=1 // pred_fallthru
      _
    // Predicated region
    $region38: #{tpu_custom_call.1} parent=1 // pred_check
      _
    $region39: #{tpu_custom_call.1} parent=1 // pred_check_branch
      %60 = sbr.rel (0) target = $region41
    $region40: #{tpu_custom_call.1} parent=1 // pred_region
      _
    $region41: #{tpu_custom_call.1} parent=1 // pred_fallthru
      _
    // Predicated region
    $region42: #{tpu_custom_call.1} parent=1 // pred_check
      _
    $region43: #{tpu_custom_call.1} parent=1 // pred_check_branch
      %62 = sbr.rel (0) target = $region45
    $region44: #{tpu_custom_call.1} parent=1 // pred_region
      _
    $region45: #{tpu_custom_call.1} parent=1 // pred_fallthru
      _
    // Predicated region
    $region46: #{tpu_custom_call.1} parent=1 // pred_check
      _
    $region47: #{tpu_custom_call.1} parent=1 // pred_check_branch
      %64 = sbr.rel (0) target = $region49
    $region48: #{tpu_custom_call.1} parent=1 // pred_region
      _
    $region49: #{tpu_custom_call.1} parent=1 // pred_fallthru
      _
    // Predicated region
    $region50: #{tpu_custom_call.1} parent=1 // pred_check
      _
    $region51: #{tpu_custom_call.1} parent=1 // pred_check_branch
      %66 = sbr.rel (0) target = $region53
    $region52: #{tpu_custom_call.1} parent=1 // pred_region
      _
    $region53: #{tpu_custom_call.1} parent=1 // pred_fallthru
      _
    // Predicated region
    $region54: #{tpu_custom_call.1} parent=1 // pred_check
      _
    $region55: #{tpu_custom_call.1} parent=1 // pred_check_branch
      %68 = sbr.rel (0) target = $region57
    $region56: #{tpu_custom_call.1} parent=1 // pred_region
      _
    $region57: #{tpu_custom_call.1} parent=1 // pred_fallthru
      _
    // Predicated region
    $region58: #{tpu_custom_call.1} parent=1 // pred_check
      _
    $region59: #{tpu_custom_call.1} parent=1 // pred_check_branch
      %70 = sbr.rel (0) target = $region61
    $region60: #{tpu_custom_call.1} parent=1 // pred_region
      _
    $region61: #{tpu_custom_call.1} parent=1 // pred_fallthru
      _
    // Predicated region
    $region62: #{tpu_custom_call.1} parent=1 // pred_check
      _
    $region63: #{tpu_custom_call.1} parent=1 // pred_check_branch
      %72 = sbr.rel (0) target = $region65
    $region64: #{tpu_custom_call.1} parent=1 // pred_region
      _
    $region65: #{tpu_custom_call.1} parent=1 // pred_fallthru
      _
    // Predicated region
    $region66: #{tpu_custom_call.1} parent=1 // pred_check
      _
    $region67: #{tpu_custom_call.1} parent=1 // pred_check_branch
      %74 = sbr.rel (0) target = $region69
    $region68: #{tpu_custom_call.1} parent=1 // pred_region
      _
    $region69: #{tpu_custom_call.1} parent=1 // pred_fallthru
      _
    // Predicated region
    $region70: #{tpu_custom_call.1} parent=1 // pred_check
      _
    $region71: #{tpu_custom_call.1} parent=1 // pred_check_branch
      %76 = sbr.rel (0) target = $region73
    $region72: #{tpu_custom_call.1} parent=1 // pred_region
      %78 = dma.done [#allocation6], 256
    $region73: #{tpu_custom_call.1} parent=1 // pred_fallthru
      _
    %v79 = vld [vmem:[#allocation5] sm:$0xff]
    %v80 = vld [vmem:[#allocation5 + $0x8] sm:$0xff]
    %v81 = vld [vmem:[%s1] sm:$0xff]
    %v82 = vld [vmem:[%s1 + $0x8] sm:$0xff]
    %v83 = vld [vmem:[%s1 + $0x10] sm:$0xff]
    %v84 = vld [vmem:[%s1 + $0x18] sm:$0xff]
    %v85 = vld [vmem:[%s2] sm:$0x1]
    %v87 = vperm.slane %v85, 0
    %vm89 = vcmask 261120
    %v91 = vsel %vm89, %v79, 0
    %v94 = vsel %vm89, %v80, 0
    %96 = vmatpush.msra.mxu0 0.0
    %97 = vmatpush.msra.mxu0 0.0
    %98 = vmatpush.msra.mxu0 0.0
    %99 = vmatpush.msra.mxu0 0.0
    %100 = vmatpush.msra.mxu0 0.0
    %101 = vmatpush.msra.mxu0 0.0
    %102 = vmatpush.msra.mxu0 0.0
    %103 = vmatpush.msra.mxu0 0.0
    %104 = vmatpush.msra.mxu0 0.0
    %105 = vmatpush.msra.mxu0 0.0
    %106 = vmatpush.msra.mxu0 0.0
    %107 = vmatpush.msra.mxu0 0.0
    %108 = vmatpush.msra.mxu0 %v84
    %109 = vmatpush.msra.mxu0 %v83
    %110 = vmatpush.msra.mxu0 %v82
    %111 = vmatpush.msra.mxu0 %v81
    %112 = vmatmul.f32.gmra.mxu0 %v91
    %v113 = vpop.f32.mrf.mxu0
    %v114 = vadd.f32 %v87, %v113
    %115 = vmatmul.f32.gmra.mxu0 %v94
    %v116 = vpop.f32.mrf.mxu0
    %v117 = vadd.f32 %v87, %v116
    %118 = vdwg.mxu0
    %v119 = vld [vmem:[%s3] sm:$0x1]
    %v120 = vld [vmem:[%s4] sm:$0x1]
    %vm121 = vcmask 523264
    %v122 = vsel %vm121, %v114, 0.0
    %123 = vadd.xlane.f32.xlu0 %v122
    %v124 = vpop.xlane.xlu0 %123
    %v125 = vsel %vm121, %v117, 0.0
    %126 = vadd.xlane.f32.xlu0 %v125
    %v127 = vpop.xlane.xlu0 %126
    %v128 = vrcp.pop 64.0
    %v129 = vmul.f32 64.0, %v128
    %v130 = vsub.f32 1.0, %v129
    %v131 = vmul.f32 %v128, %v130
    %v132 = vadd.f32 %v128, %v131
    %vm133 = vweird.f32 %v128
    %v134 = vsel %vm133, %v128, %v132
    %v135 = vmul.f32 %v124, %v134
    %v136 = vmul.f32 %v127, %v134
    %v137 = vmul.f32 %v114, %v114
    %v138 = vmul.f32 %v117, %v117
    %v139 = vsel %vm121, %v137, 0.0
    %140 = vadd.xlane.f32.xlu0 %v139
    %v141 = vpop.xlane.xlu0 %140
    %v142 = vsel %vm121, %v138, 0.0
    %143 = vadd.xlane.f32.xlu0 %v142
    %v144 = vpop.xlane.xlu0 %143
    %v145 = vmul.f32 %v141, %v134
    %v146 = vmul.f32 %v144, %v134
    %v147 = vmul.f32 %v135, %v135
    %v148 = vmul.f32 %v136, %v136
    %v149 = vsub.f32 %v145, %v147
    %v150 = vsub.f32 %v146, %v148
    %v151 = vmax.f32 %v149, 0.0
    %v152 = vmax.f32 %v150, 0.0
    %v153 = vsub.f32 %v114, %v135
    %v154 = vsub.f32 %v117, %v136
    %v155 = vadd.f32 %v151, 1e-05
    %v156 = vadd.f32 %v152, 1e-05
    %v157 = vrsqrt.pop %v155
    %v158 = vmul.f32 %v157, %v155
    %v159 = vmul.f32 %v158, %v157
    %v160 = vmul.f32 0.5, %v159
    %v161 = vsub.f32 1.5, %v160
    %v162 = vmul.f32 %v157, %v161
    %vm163 = vweird.f32 %v155
    %vm164 = vweird.f32 %v157
    %vm165 = vmor %vm163, %vm164
    %v166 = vsel %vm165, %v157, %v162
    %v167 = vrsqrt.pop %v156
    %v168 = vmul.f32 %v167, %v156
    %v169 = vmul.f32 %v168, %v167
    %v170 = vmul.f32 0.5, %v169
    %v171 = vsub.f32 1.5, %v170
    %v172 = vmul.f32 %v167, %v171
    %vm173 = vweird.f32 %v156
    %vm174 = vweird.f32 %v167
    %vm175 = vmor %vm173, %vm174
    %v176 = vsel %vm175, %v167, %v172
    %v177 = vmul.f32 %v153, %v166
    %v178 = vmul.f32 %v154, %v176
    %v180 = vperm.slane %v119, 0
    %v182 = vmul.f32 %v177, %v180
    %v183 = vmul.f32 %v178, %v180
    %v185 = vperm.slane %v120, 0
    %v187 = vadd.f32 %v182, %v185
    %v188 = vadd.f32 %v183, %v185
    %v189 = vmax.f32 %v187, 0.0
    %v190 = vmax.f32 %v188, 0.0
    %v191 = vld [vmem:[%s5] sm:$0xff]
    %v192 = vld [vmem:[%s5 + $0x8] sm:$0xff]
    %v193 = vld [vmem:[%s5 + $0x10] sm:$0xff]
    %v194 = vld [vmem:[%s5 + $0x18] sm:$0xff]
    %v195 = vld [vmem:[%s5 + $0x20] sm:$0xff]
    %v196 = vld [vmem:[%s5 + $0x28] sm:$0xff]
    %v197 = vld [vmem:[%s5 + $0x30] sm:$0xff]
    %v198 = vld [vmem:[%s5 + $0x38] sm:$0xff]
    %v199 = vld [vmem:[%s6] sm:$0x1]
    %v201 = vperm.slane %v199, 0
    %v204 = vsel %vm121, %v189, 0
    %v207 = vsel %vm121, %v190, 0
    %209 = vmatpush.msra.mxu0 0.0
    %210 = vmatpush.msra.mxu0 0.0
    %211 = vmatpush.msra.mxu0 0.0
    %212 = vmatpush.msra.mxu0 0.0
    %213 = vmatpush.msra.mxu0 0.0
    %214 = vmatpush.msra.mxu0 0.0
    %215 = vmatpush.msra.mxu0 0.0
    %216 = vmatpush.msra.mxu0 0.0
    %217 = vmatpush.msra.mxu0 %v198
    %218 = vmatpush.msra.mxu0 %v197
    %219 = vmatpush.msra.mxu0 %v196
    %220 = vmatpush.msra.mxu0 %v195
    %221 = vmatpush.msra.mxu0 %v194
    %222 = vmatpush.msra.mxu0 %v193
    %223 = vmatpush.msra.mxu0 %v192
    %224 = vmatpush.msra.mxu0 %v191
    %225 = vmatmul.f32.gmra.mxu0 %v204
    %v226 = vpop.f32.mrf.mxu0
    %v227 = vadd.f32 %v201, %v226
    %228 = vmatmul.f32.gmra.mxu0 %v207
    %v229 = vpop.f32.mrf.mxu0
    %v230 = vadd.f32 %v201, %v229
    %231 = vdwg.mxu0
    %v232 = vld [vmem:[%s7] sm:$0x1]
    %v233 = vld [vmem:[%s8] sm:$0x1]
    %v234 = vsel %vm89, %v227, 0.0
    %235 = vadd.xlane.f32.xlu0 %v234
    %v236 = vpop.xlane.xlu0 %235
    %v237 = vsel %vm89, %v230, 0.0
    %238 = vadd.xlane.f32.xlu0 %v237
    %v239 = vpop.xlane.xlu0 %238
    %v240 = vrcp.pop 32.0
    %v241 = vmul.f32 32.0, %v240
    %v242 = vsub.f32 1.0, %v241
    %v243 = vmul.f32 %v240, %v242
    %v244 = vadd.f32 %v240, %v243
    %vm245 = vweird.f32 %v240
    %v246 = vsel %vm245, %v240, %v244
    %v247 = vmul.f32 %v236, %v246
    %v248 = vmul.f32 %v239, %v246
    %v249 = vmul.f32 %v227, %v227
    %v250 = vmul.f32 %v230, %v230
    %v251 = vsel %vm89, %v249, 0.0
    %252 = vadd.xlane.f32.xlu0 %v251
    %v253 = vpop.xlane.xlu0 %252
    %v254 = vsel %vm89, %v250, 0.0
    %255 = vadd.xlane.f32.xlu0 %v254
    %v256 = vpop.xlane.xlu0 %255
    %v257 = vmul.f32 %v253, %v246
    %v258 = vmul.f32 %v256, %v246
    %v259 = vmul.f32 %v247, %v247
    %v260 = vmul.f32 %v248, %v248
    %v261 = vsub.f32 %v257, %v259
    %v262 = vsub.f32 %v258, %v260
    %v263 = vmax.f32 %v261, 0.0
    %v264 = vmax.f32 %v262, 0.0
    %v265 = vsub.f32 %v227, %v247
    %v266 = vsub.f32 %v230, %v248
    %v267 = vadd.f32 %v263, 1e-05
    %v268 = vadd.f32 %v264, 1e-05
    %v269 = vrsqrt.pop %v267
    %v270 = vmul.f32 %v269, %v267
    %v271 = vmul.f32 %v270, %v269
    %v272 = vmul.f32 0.5, %v271
    %v273 = vsub.f32 1.5, %v272
    %v274 = vmul.f32 %v269, %v273
    %vm275 = vweird.f32 %v267
    %vm276 = vweird.f32 %v269
    %vm277 = vmor %vm275, %vm276
    %v278 = vsel %vm277, %v269, %v274
    %v279 = vrsqrt.pop %v268
    %v280 = vmul.f32 %v279, %v268
    %v281 = vmul.f32 %v280, %v279
    %v282 = vmul.f32 0.5, %v281
    %v283 = vsub.f32 1.5, %v282
    %v284 = vmul.f32 %v279, %v283
    %vm285 = vweird.f32 %v268
    %vm286 = vweird.f32 %v279
    %vm287 = vmor %vm285, %vm286
    %v288 = vsel %vm287, %v279, %v284
    %v289 = vmul.f32 %v265, %v278
    %v290 = vmul.f32 %v266, %v288
    %v292 = vperm.slane %v232, 0
    %v294 = vmul.f32 %v289, %v292
    %v295 = vmul.f32 %v290, %v292
    %v297 = vperm.slane %v233, 0
    %v299 = vadd.f32 %v294, %v297
    %v300 = vadd.f32 %v295, %v297
    %v301 = vmax.f32 %v299, 0.0
    %v302 = vmax.f32 %v300, 0.0
    %v303 = vsel %vm89, %v301, 0.0
    %v304 = vrot.slane %v303, 4
    %v305 = vadd.f32 %v303, %v304
    %v306 = vrot.slane %v305, 2
    %v307 = vadd.f32 %v305, %v306
    %v308 = vrot.slane %v307, 1
    %v309 = vadd.f32 %v307, %v308
    %v310 = vsel %vm89, %v302, 0.0
    %v311 = vrot.slane %v310, 4
    %v312 = vadd.f32 %v310, %v311
    %v313 = vrot.slane %v312, 2
    %v314 = vadd.f32 %v312, %v313
    %v315 = vrot.slane %v314, 1
    %v316 = vadd.f32 %v314, %v315
    %v317 = vsub.f32 %v309, %v301
    %v318 = vsub.f32 %v316, %v302
    %321 = vrot.lane.b32.xlu0 %v317, 32
    %v322 = vpop.permute.xlu0 %321
    %323 = vrot.lane.b32.xlu0 %v318, 32
    %v324 = vpop.permute.xlu0 %323
    %v327 = vsel %vm89, %v79, %v322
    %v328 = vsel %vm89, %v80, %v324
    %v329 = vld [vmem:[%s9] sm:$0xff]
    %v330 = vld [vmem:[%s9 + $0x8] sm:$0xff]
    %v331 = vld [vmem:[%s9 + $0x10] sm:$0xff]
    %v332 = vld [vmem:[%s9 + $0x18] sm:$0xff]
    %v333 = vld [vmem:[%s9 + $0x20] sm:$0xff]
    %v334 = vld [vmem:[%s9 + $0x28] sm:$0xff]
    %v335 = vld [vmem:[%s9 + $0x30] sm:$0xff]
    %v336 = vld [vmem:[%s9 + $0x38] sm:$0xff]
    %v337 = vld [vmem:[%s10] sm:$0x1]
    %v339 = vperm.slane %v337, 0
    %v342 = vsel %vm121, %v327, 0
    %v345 = vsel %vm121, %v328, 0
    %347 = vmatpush.msra.mxu0 0.0
    %348 = vmatpush.msra.mxu0 0.0
    %349 = vmatpush.msra.mxu0 0.0
    %350 = vmatpush.msra.mxu0 0.0
    %351 = vmatpush.msra.mxu0 0.0
    %352 = vmatpush.msra.mxu0 0.0
    %353 = vmatpush.msra.mxu0 0.0
    %354 = vmatpush.msra.mxu0 0.0
    %355 = vmatpush.msra.mxu0 %v336
    %356 = vmatpush.msra.mxu0 %v335
    %357 = vmatpush.msra.mxu0 %v334
    %358 = vmatpush.msra.mxu0 %v333
    %359 = vmatpush.msra.mxu0 %v332
    %360 = vmatpush.msra.mxu0 %v331
    %361 = vmatpush.msra.mxu0 %v330
    %362 = vmatpush.msra.mxu0 %v329
    %363 = vmatmul.f32.gmra.mxu0 %v342
    %v364 = vpop.f32.mrf.mxu0
    %v365 = vadd.f32 %v339, %v364
    %366 = vmatmul.f32.gmra.mxu0 %v345
    %v367 = vpop.f32.mrf.mxu0
    %v368 = vadd.f32 %v339, %v367
    %369 = vdwg.mxu0
    %v370 = vld [vmem:[%s11] sm:$0x1]
    %v371 = vld [vmem:[%s12] sm:$0x1]
    %v372 = vsel %vm121, %v365, 0.0
    %373 = vadd.xlane.f32.xlu0 %v372
    %v374 = vpop.xlane.xlu0 %373
    %v375 = vsel %vm121, %v368, 0.0
    %376 = vadd.xlane.f32.xlu0 %v375
    %v377 = vpop.xlane.xlu0 %376
    %v378 = vmul.f32 %v374, %v134
    %v379 = vmul.f32 %v377, %v134
    %v380 = vmul.f32 %v365, %v365
    %v381 = vmul.f32 %v368, %v368
    %v382 = vsel %vm121, %v380, 0.0
    %383 = vadd.xlane.f32.xlu0 %v382
    %v384 = vpop.xlane.xlu0 %383
    %v385 = vsel %vm121, %v381, 0.0
    %386 = vadd.xlane.f32.xlu0 %v385
    %v387 = vpop.xlane.xlu0 %386
    %v388 = vmul.f32 %v384, %v134
    %v389 = vmul.f32 %v387, %v134
    %v390 = vmul.f32 %v378, %v378
    %v391 = vmul.f32 %v379, %v379
    %v392 = vsub.f32 %v388, %v390
    %v393 = vsub.f32 %v389, %v391
    %v394 = vmax.f32 %v392, 0.0
    %v395 = vmax.f32 %v393, 0.0
    %v396 = vsub.f32 %v365, %v378
    %v397 = vsub.f32 %v368, %v379
    %v398 = vadd.f32 %v394, 1e-05
    %v399 = vadd.f32 %v395, 1e-05
    %v400 = vrsqrt.pop %v398
    %v401 = vmul.f32 %v400, %v398
    %v402 = vmul.f32 %v401, %v400
    %v403 = vmul.f32 0.5, %v402
    %v404 = vsub.f32 1.5, %v403
    %v405 = vmul.f32 %v400, %v404
    %vm406 = vweird.f32 %v398
    %vm407 = vweird.f32 %v400
    %vm408 = vmor %vm406, %vm407
    %v409 = vsel %vm408, %v400, %v405
    %v410 = vrsqrt.pop %v399
    %v411 = vmul.f32 %v410, %v399
    %v412 = vmul.f32 %v411, %v410
    %v413 = vmul.f32 0.5, %v412
    %v414 = vsub.f32 1.5, %v413
    %v415 = vmul.f32 %v410, %v414
    %vm416 = vweird.f32 %v399
    %vm417 = vweird.f32 %v410
    %vm418 = vmor %vm416, %vm417
    %v419 = vsel %vm418, %v410, %v415
    %v420 = vmul.f32 %v396, %v409
    %v421 = vmul.f32 %v397, %v419
    %v423 = vperm.slane %v370, 0
    %v425 = vmul.f32 %v420, %v423
    %v426 = vmul.f32 %v421, %v423
    %v428 = vperm.slane %v371, 0
    %v430 = vadd.f32 %v425, %v428
    %v431 = vadd.f32 %v426, %v428
    %v432 = vmax.f32 %v430, 0.0
    %v433 = vmax.f32 %v431, 0.0
    %v434 = vld [vmem:[%s13] sm:$0x1]
    %v436 = vperm.slane %v434, 0
    %v438 = vmul.f32 %v432, %v436
    %v439 = vmul.f32 %v433, %v436
    %v440 = vsel %vm121, %v438, 0.0
    %441 = vadd.xlane.f32.xlu0 %v440
    %v442 = vpop.xlane.xlu0 %441
    %v443 = vsel %vm121, %v439, 0.0
    %444 = vadd.xlane.f32.xlu0 %v443
    %v445 = vpop.xlane.xlu0 %444
    %v446 = vld [vmem:[#allocation2] sm:$0x1]
    %v448 = vperm.slane %v446, 0
    %449 = vset.pattern.permute.xlu0 0
    %450 = vperm.xlu0 %449, %v448
    %v451 = vpop.permute.xlu0 %450
    %v453 = vadd.f32 %v442, %v451
    %v454 = vadd.f32 %v445, %v451
    %v455 = vsub.f32 %v453, %v453
    %v456 = vsub.f32 %v454, %v454
    %v457 = vmul.f32 %v455, 316.22778
    %v458 = vmul.f32 %v456, 316.22778
    %v459 = vld [vmem:[#allocation3] sm:$0x1]
    %v461 = vperm.slane %v459, 0
    %462 = vset.pattern.permute.xlu0 0
    %463 = vperm.xlu0 %462, %v461
    %v464 = vpop.permute.xlu0 %463
    %v466 = vmul.f32 %v457, %v464
    %v467 = vmul.f32 %v458, %v464
    %v468 = vld [vmem:[#allocation4] sm:$0x1]
    %v470 = vperm.slane %v468, 0
    %471 = vset.pattern.permute.xlu0 0
    %472 = vperm.xlu0 %471, %v470
    %v473 = vpop.permute.xlu0 %472
    %v475 = vadd.f32 %v466, %v473
    %v476 = vadd.f32 %v467, %v473
    %v477 = vmax.f32 %v475, 0.0
    %v478 = vmax.f32 %v476, 0.0
    %v481 = vlaneseq
    %v482 = vand.u32 %v481, 127
    %v483 = vperm.slane %v477, %v482
    %v484 = vperm.slane %v478, %v482
    %vm485 = vcmask 1041409
    %v486 = vsel %vm485, %v484, %v483
    %vm488 = vcmask 58368
    %489 = vst.msk [vmem:[#allocation8] sm:$0x3] %vm488, %v486
    // Predicated region
    $region74: #{tpu_custom_call.1} parent=1 // pred_check
      _
    $region75: #{tpu_custom_call.1} parent=1 // pred_check_branch
      %491 = sbr.rel (0) target = $region77
    $region76: #{tpu_custom_call.1} parent=1 // pred_region
      %493 = vsyncadd [#allocation7], 0
      %s495 = sshll.u32 [#allocation8], 4
      %s496 = int_to_ptr.vmem [resolvable:$true] %s495
      %s497 = sshll.u32 %s17, 4
      %s498 = int_to_ptr.hbm [resolvable:$true] %s497
      %500 = dma.vmem_to_hbm [thread:$0]  %s496, 32, %s498, [#allocation7]
    $region77: #{tpu_custom_call.1} parent=1 // pred_fallthru
      _
    // Predicated region
    $region78: #{tpu_custom_call.1} parent=1 // pred_check
      _
    $region79: #{tpu_custom_call.1} parent=1 // pred_check_branch
      %502 = sbr.rel (0) target = $region81
    $region80: #{tpu_custom_call.1} parent=1 // pred_region
      %504 = dma.done [#allocation7], 32
    $region81: #{tpu_custom_call.1} parent=1 // pred_fallthru
      _
    %505 = vsyncpa [#allocation6], 1
    %506 = vsyncpa [#allocation7], 1

</llo_original>
